<compile_context>
chip_gen: v7x
topology: tpu7x:2x2x1
jax: 0.10.0
libtpu: 0.0.40
codegen_flags: <defaults>
</compile_context>

<pallas_src>
import functools

import jax
import jax.numpy as jnp
from jax import lax
from jax.experimental import pallas as pl
from jax.experimental.pallas import tpu as pltpu


def _round_up(x, m):
    return (x + m - 1) // m * m


_MASK_FILL = -1e30  # finite fill; exp(fill - shift) underflows to 0 in f32


# ---------------------------------------------------------------------------
# Small-B single-block kernel: normalize + logits + LSE + mean, all in VMEM.
# ---------------------------------------------------------------------------
def _infonce_small_kernel(q_ref, k_ref, loss_ref, *, inv_temp, fixed_shift, mxu_dtype):
    q = q_ref[...].astype(jnp.float32)          # [B, D]
    k = k_ref[...].astype(jnp.float32)          # [B, D]

    # F.normalize(x, dim=-1) == x * rsqrt(max(sum(x^2), eps^2)), eps = 1e-12.
    q_inv = lax.rsqrt(jnp.maximum(jnp.sum(q * q, axis=-1, keepdims=True), 1e-24))
    k_inv = lax.rsqrt(jnp.maximum(jnp.sum(k * k, axis=-1, keepdims=True), 1e-24))
    qs = (q * (q_inv * inv_temp)).astype(mxu_dtype)   # 1/temperature folded into q
    ks = (k * k_inv).astype(mxu_dtype)

    # logits[i, j] = <q_i, k_j> / T on the MXU, NT form (no k.T materialization).
    logits = lax.dot_general(qs, ks, (((1,), (1,)), ((), ())),
                             preferred_element_type=jnp.float32)   # [B, B]

    # Diagonal from the SAME (possibly bf16-rounded) operands -> consistent with lse.
    diag = jnp.sum(qs.astype(jnp.float32) * ks.astype(jnp.float32),
                   axis=-1, keepdims=True)                          # [B, 1]

    if fixed_shift:
        # |logits| <= 1/T  ==>  exp(logits - 1/T) in (0, 1]; no row max needed.
        lse = inv_temp + jnp.log(jnp.sum(jnp.exp(logits - inv_temp),
                                         axis=-1, keepdims=True))
    else:
        m = jnp.max(logits, axis=-1, keepdims=True)
        lse = m + jnp.log(jnp.sum(jnp.exp(logits - m), axis=-1, keepdims=True))

    b = logits.shape[0]
    loss_ref[0, 0] = jnp.sum(lse - diag) / jnp.float32(b)


# ---------------------------------------------------------------------------
# Gridded path, pass 1: normalize key rows once, store in MXU dtype (bf16 default).
# ---------------------------------------------------------------------------
def _k_normalize_kernel(k_ref, kn_ref):
    k = k_ref[...].astype(jnp.float32)          # [TK, D]
    k_inv = lax.rsqrt(jnp.maximum(jnp.sum(k * k, axis=-1, keepdims=True), 1e-24))
    kn_ref[...] = (k * k_inv).astype(kn_ref.dtype)


# ---------------------------------------------------------------------------
# Gridded path, pass 2 (default): fixed-shift LSE + in-tile diagonal extraction.
# ---------------------------------------------------------------------------
def _flash_fixed_kernel(q_ref, kn_ref, lse_ref, diag_ref, qs_sc, l_sc, d_sc, *,
                        inv_temp, valid_b, block_q, block_k, needs_mask):
    i = pl.program_id(0)
    j = pl.program_id(1)
    last_j = pl.num_programs(1) - 1

    @pl.when(j == 0)
    def _():
        # Normalize the raw query tile ONCE per i-tile (no qn HBM round-trip),
        # fold 1/temperature into q, store in the MXU dtype.
        q = q_ref[...].astype(jnp.float32)
        q_inv = lax.rsqrt(jnp.maximum(jnp.sum(q * q, axis=-1, keepdims=True), 1e-24))
        qs_sc[...] = (q * (q_inv * inv_temp)).astype(qs_sc.dtype)
        l_sc[...] = jnp.zeros_like(l_sc)
        d_sc[...] = jnp.zeros_like(d_sc)

    s = lax.dot_general(qs_sc[...], kn_ref[...], (((1,), (1,)), ((), ())),
                        preferred_element_type=jnp.float32)        # [TQ, TK]

    # Diagonal of the logits matrix, taken from the same MXU tile values.  Only
    # tiles crossed by the diagonal band pay the compare+select.
    row0 = i * block_q
    col0 = j * block_k

    @pl.when(jnp.logical_and(row0 < col0 + block_k, col0 < row0 + block_q))
    def _():
        rows = row0 + lax.broadcasted_iota(jnp.int32, s.shape, 0)
        cols = col0 + lax.broadcasted_iota(jnp.int32, s.shape, 1)
        d_sc[...] = d_sc[...] + jnp.sum(jnp.where(rows == cols, s, 0.0),
                                        axis=-1, keepdims=True)

    def _accum(sv):
        l_sc[...] = l_sc[...] + jnp.sum(jnp.exp(sv - inv_temp), axis=-1, keepdims=True)

    if needs_mask:
        # Padding mask only exists on the last key tile; other tiles skip it.
        @pl.when(j == last_j)
        def _():
            cols = col0 + lax.broadcasted_iota(jnp.int32, s.shape, 1)
            _accum(jnp.where(cols < valid_b, s, jnp.float32(_MASK_FILL)))

        @pl.when(j != last_j)
        def _():
            _accum(s)
    else:
        _accum(s)

    @pl.when(j == last_j)
    def _():
        lse_ref[...] = jnp.log(l_sc[...]) + inv_temp
        diag_ref[...] = d_sc[...]


# ---------------------------------------------------------------------------
# Gridded path, pass 2 (fallback for 1/T > ~40): classic online-max LSE.
# ---------------------------------------------------------------------------
def _flash_onlinemax_kernel(q_ref, kn_ref, lse_ref, diag_ref, qs_sc, l_sc, d_sc, m_sc,
                            *, inv_temp, valid_b, block_q, block_k, needs_mask):
    i = pl.program_id(0)
    j = pl.program_id(1)
    last_j = pl.num_programs(1) - 1

    @pl.when(j == 0)
    def _():
        q = q_ref[...].astype(jnp.float32)
        q_inv = lax.rsqrt(jnp.maximum(jnp.sum(q * q, axis=-1, keepdims=True), 1e-24))
        qs_sc[...] = (q * (q_inv * inv_temp)).astype(qs_sc.dtype)
        l_sc[...] = jnp.zeros_like(l_sc)
        d_sc[...] = jnp.zeros_like(d_sc)
        m_sc[...] = jnp.full_like(m_sc, -jnp.inf)

    s = lax.dot_general(qs_sc[...], kn_ref[...], (((1,), (1,)), ((), ())),
                        preferred_element_type=jnp.float32)        # [TQ, TK]

    row0 = i * block_q
    col0 = j * block_k

    @pl.when(jnp.logical_and(row0 < col0 + block_k, col0 < row0 + block_q))
    def _():
        rows = row0 + lax.broadcasted_iota(jnp.int32, s.shape, 0)
        cols = col0 + lax.broadcasted_iota(jnp.int32, s.shape, 1)
        d_sc[...] = d_sc[...] + jnp.sum(jnp.where(rows == cols, s, 0.0),
                                        axis=-1, keepdims=True)

    if needs_mask:
        cols = col0 + lax.broadcasted_iota(jnp.int32, s.shape, 1)
        s = jnp.where(jnp.logical_or(j != last_j, cols < valid_b),
                      s, jnp.float32(_MASK_FILL))

    m_prev = m_sc[...]
    m_new = jnp.maximum(m_prev, jnp.max(s, axis=-1, keepdims=True))
    alpha = jnp.exp(m_prev - m_new)
    l_sc[...] = alpha * l_sc[...] + jnp.sum(jnp.exp(s - m_new), axis=-1, keepdims=True)
    m_sc[...] = m_new

    @pl.when(j == last_j)
    def _():
        lse_ref[...] = m_sc[...] + jnp.log(l_sc[...])
        diag_ref[...] = d_sc[...]


# ---------------------------------------------------------------------------
# Wrapper
# ---------------------------------------------------------------------------
def infonce_loss(query, key, temperature=0.07, *,
                 block_q=256, block_k=256, small_b_limit=512,
                 use_bf16_mxu=True, k_buffer_count=2):
    """query, key: [B, embed_dim] -> scalar float32 loss (== F.cross_entropy path)."""
    assert query.shape == key.shape and query.ndim == 2
    B, D = query.shape
    inv_temp = 1.0 / float(temperature)
    # Fixed-shift LSE is valid because |logits| <= 1/T; fall back to online-max
    # only when exp(-2/T) would underflow f32 for rows with no large logit.
    fixed_shift = inv_temp <= 40.0
    mxu_dtype = jnp.bfloat16 if use_bf16_mxu else jnp.float32
    q_isz = jnp.dtype(query.dtype).itemsize
    m_isz = jnp.dtype(mxu_dtype).itemsize

    # -------- small-B fast path: one single-block kernel, everything in VMEM ----
    est_small = B * D * (2 * q_isz + 2 * 4 + 2 * m_isz) + 3 * B * B * 4
    if B <= small_b_limit and est_small <= 12 * 1024 * 1024:
        out = pl.pallas_call(
            functools.partial(_infonce_small_kernel, inv_temp=inv_temp,
                              fixed_shift=fixed_shift, mxu_dtype=mxu_dtype),
            out_shape=jax.ShapeDtypeStruct((1, 1), jnp.float32),
            in_specs=[
                pl.BlockSpec(memory_space=pltpu.VMEM),
                pl.BlockSpec(memory_space=pltpu.VMEM),
            ],
            out_specs=pl.BlockSpec(memory_space=pltpu.SMEM),
            compiler_params=pltpu.CompilerParams(
                vmem_limit_bytes=min(max(32 * 1024 * 1024, 2 * est_small),
                                     96 * 1024 * 1024)),
        )(query, key)
        return out[0, 0]

    # -------- gridded flash-style path ------------------------------------------
    # Pad Q and K row counts independently (zero rows normalize to zero vectors).
    Qpad = _round_up(B, block_q)
    Kpad = _round_up(B, block_k)
    q = query
    k = key
    if Qpad != B:
        q = jnp.pad(q, ((0, Qpad - B), (0, 0)))
    if Kpad != B:
        k = jnp.pad(k, ((0, Kpad - B), (0, 0)))
    needs_mask = (Kpad != B)

    # Pass 1: normalize key rows once, store in the MXU dtype (bf16 by default).
    kn = pl.pallas_call(
        _k_normalize_kernel,
        out_shape=jax.ShapeDtypeStruct((Kpad, D), mxu_dtype),
        grid=(Kpad // block_k,),
        in_specs=[pl.BlockSpec((block_k, D), lambda j: (j, 0))],
        out_specs=pl.BlockSpec((block_k, D), lambda j: (j, 0)),
        compiler_params=pltpu.CompilerParams(dimension_semantics=("parallel",)),
    )(k)

    # Optional deeper pipelining on the streamed key tiles (off by default).
    if k_buffer_count > 2:
        kn_spec = pl.BlockSpec((block_k, D), lambda i, j: (j, 0),
                               pipeline_mode=pl.Buffered(k_buffer_count))
    else:
        kn_spec = pl.BlockSpec((block_k, D), lambda i, j: (j, 0))

    kernel = _flash_fixed_kernel if fixed_shift else _flash_onlinemax_kernel
    scratch = [
        pltpu.VMEM((block_q, D), mxu_dtype),      # normalized, 1/T-scaled q tile
        pltpu.VMEM((block_q, 1), jnp.float32),    # running sum l_i
        pltpu.VMEM((block_q, 1), jnp.float32),    # logits diagonal
    ]
    if not fixed_shift:
        scratch.append(pltpu.VMEM((block_q, 1), jnp.float32))   # running max m_i

    # Rough VMEM budget (double-buffered q + kn tiles + scratch); raises v5e's
    # 16 MiB scoped default, stays within v7x's 64 MiB per-TensorCore VMEM for
    # sane tile sizes.
    est = (2 * block_q * D * q_isz
           + max(2, k_buffer_count) * block_k * D * m_isz
           + block_q * D * m_isz + 64 * 1024)
    vmem_limit = min(max(32 * 1024 * 1024, 2 * est), 96 * 1024 * 1024)

    # Pass 2: fixed-shift (or online-max fallback) LSE over key tiles + diagonal.
    lse, diag = pl.pallas_call(
        functools.partial(kernel, inv_temp=inv_temp, valid_b=B,
                          block_q=block_q, block_k=block_k, needs_mask=needs_mask),
        out_shape=(jax.ShapeDtypeStruct((Qpad, 1), jnp.float32),
                   jax.ShapeDtypeStruct((Qpad, 1), jnp.float32)),
        grid=(Qpad // block_q, Kpad // block_k),
        in_specs=[pl.BlockSpec((block_q, D), lambda i, j: (i, 0)), kn_spec],
        out_specs=(pl.BlockSpec((block_q, 1), lambda i, j: (i, 0)),
                   pl.BlockSpec((block_q, 1), lambda i, j: (i, 0))),
        scratch_shapes=scratch,
        compiler_params=pltpu.CompilerParams(
            dimension_semantics=("parallel", "arbitrary"),
            vmem_limit_bytes=vmem_limit),
    )(q, kn)

    # Final trivial reduction over the valid B rows (padded rows sliced off).
    return jnp.mean(lse[:B, 0] - diag[:B, 0])


# ---------------------------------------------------------------------------
# Pure-JAX reference (high-precision matmul so the f32 kernel can be checked tightly)
# ---------------------------------------------------------------------------
def _infonce_ref(query, key, temperature=0.07):
    q = query / jnp.maximum(jnp.linalg.norm(query, axis=-1, keepdims=True), 1e-12)
    k = key / jnp.maximum(jnp.linalg.norm(key, axis=-1, keepdims=True), 1e-12)
    logits = jnp.dot(q, k.T, precision=lax.Precision.HIGHEST) / temperature
    n = logits.shape[0]
    logp = jax.nn.log_softmax(logits, axis=-1)
    return -jnp.mean(logp[jnp.arange(n), jnp.arange(n)])


if __name__ == "__main__":
    root = jax.random.PRNGKey(0)
    s1, s2, s3, s4 = jax.random.split(root, 4)

    # ---- small-B single-block path ([B, embed_dim] = [8, 32]) ----
    B, D = 8, 32
    q = jax.random.normal(s1, (B, D), dtype=jnp.float32)
    k = jax.random.normal(s2, (B, D), dtype=jnp.float32)
    ref = _infonce_ref(q, k, 0.07)

    loss_f32 = jax.block_until_ready(infonce_loss(q, k, 0.07, use_bf16_mxu=False))
    assert jnp.allclose(loss_f32, ref, atol=1e-4, rtol=1e-4), (loss_f32, ref)

    loss_bf16 = jax.block_until_ready(infonce_loss(q, k, 0.07))      # bf16 MXU default
    assert jnp.allclose(loss_bf16, ref, atol=5e-2, rtol=5e-2), (loss_bf16, ref)

    # ---- gridded flash-style path (B=640 -> 3x3 grid of 256 tiles, padding mask) ----
    B2, D2 = 640, 64
    q2 = jax.random.normal(s3, (B2, D2), dtype=jnp.float32)
    k2 = jax.random.normal(s4, (B2, D2), dtype=jnp.float32)
    ref2 = _infonce_ref(q2, k2, 0.07)

    loss2_f32 = jax.block_until_ready(infonce_loss(q2, k2, 0.07, use_bf16_mxu=False))
    assert jnp.allclose(loss2_f32, ref2, atol=1e-4, rtol=1e-4), (loss2_f32, ref2)

    loss2_bf16 = jax.block_until_ready(infonce_loss(q2, k2, 0.07))   # bf16 MXU default
    assert jnp.allclose(loss2_bf16, ref2, atol=5e-2, rtol=5e-2), (loss2_bf16, ref2)

    # ---- extreme temperature -> online-max fallback kernel ----
    ref3 = _infonce_ref(q2, k2, 0.02)
    loss3 = jax.block_until_ready(infonce_loss(q2, k2, 0.02, use_bf16_mxu=False))
    assert jnp.allclose(loss3, ref3, atol=5e-3, rtol=5e-3), (loss3, ref3)

    print("KERNEL_OK")
</pallas_src>

<mosaic_0001>
module attributes {stable_mosaic.version = 11 : i64} {
  func.func @_infonce_small_kernel(%arg0: memref<8x32xf32, #tpu.memory_space<vmem>>, %arg1: memref<8x32xf32, #tpu.memory_space<vmem>>, %arg2: memref<1x1xf32, #tpu.memory_space<smem>>) attributes {dimension_semantics = [], scalar_prefetch = 0 : i64, scratch_operands = 0 : i64, tpu.core_type = #tpu.core_type<tc>} {
    %c0 = arith.constant 0 : index
    %c0_0 = arith.constant 0 : index
    %0 = vector.load %arg0[%c0, %c0_0] : memref<8x32xf32, #tpu.memory_space<vmem>>, vector<8x32xf32>
    %c0_1 = arith.constant 0 : index
    %c0_2 = arith.constant 0 : index
    %1 = vector.load %arg1[%c0_1, %c0_2] : memref<8x32xf32, #tpu.memory_space<vmem>>, vector<8x32xf32>
    %2 = arith.mulf %0, %0 : vector<8x32xf32>
    %cst = arith.constant dense<0.000000e+00> : vector<8xf32>
    %3 = vector.multi_reduction <add>, %2, %cst [1] : vector<8x32xf32> to vector<8xf32>
    %4 = vector.shape_cast %3 : vector<8xf32> to vector<8x1xf32>
    %cst_3 = arith.constant 1.000000e-24 : f32
    %5 = vector.broadcast %cst_3 : f32 to vector<8x1xf32>
    %6 = arith.maximumf %4, %5 : vector<8x1xf32>
    %7 = math.rsqrt %6 : vector<8x1xf32>
    %8 = arith.mulf %1, %1 : vector<8x32xf32>
    %cst_4 = arith.constant dense<0.000000e+00> : vector<8xf32>
    %9 = vector.multi_reduction <add>, %8, %cst_4 [1] : vector<8x32xf32> to vector<8xf32>
    %10 = vector.shape_cast %9 : vector<8xf32> to vector<8x1xf32>
    %cst_5 = arith.constant 1.000000e-24 : f32
    %11 = vector.broadcast %cst_5 : f32 to vector<8x1xf32>
    %12 = arith.maximumf %10, %11 : vector<8x1xf32>
    %13 = math.rsqrt %12 : vector<8x1xf32>
    %cst_6 = arith.constant 14.2857141 : f32
    %14 = vector.broadcast %cst_6 : f32 to vector<8x1xf32>
    %15 = arith.mulf %7, %14 : vector<8x1xf32>
    %16 = vector.broadcast %15 : vector<8x1xf32> to vector<8x32xf32>
    %17 = arith.mulf %0, %16 : vector<8x32xf32>
    %18 = vector.broadcast %13 : vector<8x1xf32> to vector<8x32xf32>
    %19 = arith.mulf %1, %18 : vector<8x32xf32>
    %cst_7 = arith.constant dense<0.000000e+00> : vector<8x8xf32>
    %20 = tpu.matmul %17, %19, %cst_7 {dimension_numbers = #tpu.dot_dimension_numbers<[1], [1], [0], [0], [0, 0, 1, 0], [], []>} : vector<8x32xf32>, vector<8x32xf32>, vector<8x8xf32> -> vector<8x8xf32>
    %21 = arith.mulf %17, %19 : vector<8x32xf32>
    %cst_8 = arith.constant dense<0.000000e+00> : vector<8xf32>
    %22 = vector.multi_reduction <add>, %21, %cst_8 [1] : vector<8x32xf32> to vector<8xf32>
    %23 = vector.shape_cast %22 : vector<8xf32> to vector<8x1xf32>
    %cst_9 = arith.constant 14.2857141 : f32
    %24 = vector.broadcast %cst_9 : f32 to vector<8x8xf32>
    %25 = arith.subf %20, %24 : vector<8x8xf32>
    %26 = math.exp %25 : vector<8x8xf32>
    %cst_10 = arith.constant dense<0.000000e+00> : vector<8xf32>
    %27 = vector.multi_reduction <add>, %26, %cst_10 [1] : vector<8x8xf32> to vector<8xf32>
    %28 = vector.shape_cast %27 : vector<8xf32> to vector<8x1xf32>
    %29 = math.log %28 : vector<8x1xf32>
    %cst_11 = arith.constant 14.2857141 : f32
    %30 = vector.broadcast %cst_11 : f32 to vector<8x1xf32>
    %31 = arith.addf %30, %29 : vector<8x1xf32>
    %32 = arith.subf %31, %23 : vector<8x1xf32>
    %33 = vector.shape_cast %32 : vector<8x1xf32> to vector<1x8x1xf32>
    %cst_12 = arith.constant dense<0.000000e+00> : vector<1xf32>
    %34 = vector.multi_reduction <add>, %33, %cst_12 [1, 2] : vector<1x8x1xf32> to vector<1xf32>
    %35 = vector.shape_cast %34 : vector<1xf32> to vector<1x1x1xf32>
    %36 = vector.extract %35[0, 0, 0] : f32 from vector<1x1x1xf32>
    %cst_13 = arith.constant 8.000000e+00 : f32
    %37 = arith.divf %36, %cst_13 : f32
    %c0_14 = arith.constant 0 : index
    %c0_15 = arith.constant 0 : index
    %38 = memref.load %arg2[%c0_14, %c0_15] : memref<1x1xf32, #tpu.memory_space<smem>>
    memref.store %37, %arg2[%c0_14, %c0_15] : memref<1x1xf32, #tpu.memory_space<smem>>
    return
  }
}

</mosaic_0001>

<llo_original>
// kernel: tpu_custom_call.1
$region0: #{tpu_custom_call.1}
  #allocation0 [shape = 'u32[]', space=smem, size = 0x4, offset = 0x4, fixed_abs, tag = 'smem constant byte address 0x4 - core index']
  #allocation1 [shape = 'u32[144,128]{1,0:T(1,128)}', space=vmem, size = 0x12000, scoped, tag = 'internal scratch']
  %s0 = inlined_call_operand.hbm [shape: f32[8,32], index: 0, kind: input, shape index: {}]
  %s1 = inlined_call_operand.hbm [shape: f32[8,32], index: 1, kind: input, shape index: {}]
  %s2 = inlined_call_operand.hbm [shape: f32[1,1], index: 2, kind: output, shape index: {}]
  %s3 = sld [smem:[#allocation0]]
  $region26: #{tpu_custom_call.1} parent=0
    _
  %s5 = ssub.s32 1, %s3
  %s6 = scalar_select 0, %s5, %s3
  $region1: #{tpu_custom_call.1} parent=0
    #allocation2 [shape = 'u8[4096]{0}', space=vmem, size = 0x1000, scoped, tag = 'input window, operand 0, single buffered']
    #allocation3 [shape = 's32[1]{0}', space=sflag, size = 0x4, scoped, tag = 'scoped memory for tpu_custom_call.1']
    #allocation4 [shape = 's32[1]{0}', space=sflag, size = 0x4, scoped, tag = 'scoped memory for tpu_custom_call.1']
    #allocation5 [shape = 'u8[4096]{0}', space=vmem, size = 0x1000, scoped, tag = 'input window, operand 1, single buffered']
    #allocation6 [shape = 's32[1]{0}', space=sflag, size = 0x4, scoped, tag = 'scoped memory for tpu_custom_call.1']
    #allocation7 [shape = 'u8[512]{0}', space=smem, size = 0x200, scoped, tag = 'output window, operand 0, single buffered']
    %7 = vsyncpa [#allocation3], 0
    %8 = vsyncpa [#allocation6], 0
    %9 = vsyncpa [#allocation4], 0
    // Predicated region
    $region2: #{tpu_custom_call.1} parent=1 // pred_check
      _
    $region3: #{tpu_custom_call.1} parent=1 // pred_check_branch
      %11 = sbr.rel (0) target = $region5
    $region4: #{tpu_custom_call.1} parent=1 // pred_region
      %s13 = ssub.s32 128, 128
      %14 = vsyncadd [#allocation3], %s13
      %s16 = sshll.u32 [#allocation2], 4
      %s17 = int_to_ptr.vmem [resolvable:$true] %s16
      %19 = dma.hbm_to_vmem [thread:$0]  %s0, 128, %s17, [#allocation3]
    $region5: #{tpu_custom_call.1} parent=1 // pred_fallthru
      _
    // Predicated region
    $region6: #{tpu_custom_call.1} parent=1 // pred_check
      _
    $region7: #{tpu_custom_call.1} parent=1 // pred_check_branch
      %21 = sbr.rel (0) target = $region9
    $region8: #{tpu_custom_call.1} parent=1 // pred_region
      %s23 = ssub.s32 128, 128
      %24 = vsyncadd [#allocation6], %s23
      %s26 = sshll.u32 [#allocation5], 4
      %s27 = int_to_ptr.vmem [resolvable:$true] %s26
      %29 = dma.hbm_to_vmem [thread:$0]  %s1, 128, %s27, [#allocation6]
    $region9: #{tpu_custom_call.1} parent=1 // pred_fallthru
      _
    // Predicated region
    $region10: #{tpu_custom_call.1} parent=1 // pred_check
      _
    $region11: #{tpu_custom_call.1} parent=1 // pred_check_branch
      %31 = sbr.rel (0) target = $region13
    $region12: #{tpu_custom_call.1} parent=1 // pred_region
      %32 = dma.done [#allocation3], 128
    $region13: #{tpu_custom_call.1} parent=1 // pred_fallthru
      _
    // Predicated region
    $region14: #{tpu_custom_call.1} parent=1 // pred_check
      _
    $region15: #{tpu_custom_call.1} parent=1 // pred_check_branch
      %34 = sbr.rel (0) target = $region17
    $region16: #{tpu_custom_call.1} parent=1 // pred_region
      %35 = dma.done [#allocation6], 128
    $region17: #{tpu_custom_call.1} parent=1 // pred_fallthru
      _
    %v36 = vld [vmem:[#allocation2] sm:$0xff]
    %v37 = vld [vmem:[#allocation5] sm:$0xff]
    %v38 = vmul.f32 %v36, %v36
    %vm39 = vcmask 261120
    %v40 = vsel %vm39, %v38, 0.0
    %41 = vadd.xlane.f32.xlu0 %v40
    %v42 = vpop.xlane.xlu0 %41
    %v43 = vmax.f32 %v42, 1e-24
    %v44 = vrsqrt.pop %v43
    %v45 = vmul.f32 %v37, %v37
    %v46 = vsel %vm39, %v45, 0.0
    %47 = vadd.xlane.f32.xlu0 %v46
    %v48 = vpop.xlane.xlu0 %47
    %v49 = vmax.f32 %v48, 1e-24
    %v50 = vrsqrt.pop %v49
    %v51 = vmul.f32 %v44, 14.285714
    %v52 = vmul.f32 %v36, %v51
    %v53 = vmul.f32 %v37, %v50
    %v55 = vsel %vm39, %v52, 0
    %v58 = vsel %vm39, %v53, 0
    %60 = vmatprep.subr.mxu0 0.0
    %61 = vmatpush1.xpose.msra.mxu0 %v58
    %62 = vmatprep.subr.mxu0 0.0
    %63 = vmatpush1.xpose.msra.mxu0 0.0
    %64 = vmatprep.subr.mxu0 0.0
    %65 = vmatpush1.xpose.msra.mxu0 0.0
    %66 = vmatprep.subr.mxu0 0.0
    %67 = vmatpush1.xpose.msra.mxu0 0.0
    %68 = vmatprep.subr.mxu0 0.0
    %69 = vmatpush1.xpose.msra.mxu0 0.0
    %70 = vmatprep.subr.mxu0 0.0
    %71 = vmatpush1.xpose.msra.mxu0 0.0
    %72 = vmatprep.subr.mxu0 0.0
    %73 = vmatpush1.xpose.msra.mxu0 0.0
    %74 = vmatprep.subr.mxu0 0.0
    %75 = vmatpush1.xpose.msra.mxu0 0.0
    %76 = vmatprep.subr.mxu0 0.0
    %77 = vmatpush1.xpose.msra.mxu0 0.0
    %78 = vmatprep.subr.mxu0 0.0
    %79 = vmatpush1.xpose.msra.mxu0 0.0
    %80 = vmatprep.subr.mxu0 0.0
    %81 = vmatpush1.xpose.msra.mxu0 0.0
    %82 = vmatprep.subr.mxu0 0.0
    %83 = vmatpush1.xpose.msra.mxu0 0.0
    %84 = vmatprep.subr.mxu0 0.0
    %85 = vmatpush1.xpose.msra.mxu0 0.0
    %86 = vmatprep.subr.mxu0 0.0
    %87 = vmatpush1.xpose.msra.mxu0 0.0
    %88 = vmatprep.subr.mxu0 0.0
    %89 = vmatpush1.xpose.msra.mxu0 0.0
    %90 = vmatprep.subr.mxu0 0.0
    %91 = vmatpush1.xpose.msra.mxu0 0.0
    %92 = vmatprep.subr.mxu0 0.0
    %93 = vmatpush1.xpose.msra.mxu0 0.0
    %94 = vmatprep.subr.mxu0 0.0
    %95 = vmatpush1.xpose.msra.mxu0 0.0
    %96 = vmatprep.subr.mxu0 0.0
    %97 = vmatpush1.xpose.msra.mxu0 0.0
    %98 = vmatprep.subr.mxu0 0.0
    %99 = vmatpush1.xpose.msra.mxu0 0.0
    %100 = vmatprep.subr.mxu0 0.0
    %101 = vmatpush1.xpose.msra.mxu0 0.0
    %102 = vmatprep.subr.mxu0 0.0
    %103 = vmatpush1.xpose.msra.mxu0 0.0
    %104 = vmatprep.subr.mxu0 0.0
    %105 = vmatpush1.xpose.msra.mxu0 0.0
    %106 = vmatprep.subr.mxu0 0.0
    %107 = vmatpush1.xpose.msra.mxu0 0.0
    %108 = vmatprep.subr.mxu0 0.0
    %109 = vmatpush1.xpose.msra.mxu0 0.0
    %110 = vmatprep.subr.mxu0 0.0
    %111 = vmatpush1.xpose.msra.mxu0 0.0
    %112 = vmatprep.subr.mxu0 0.0
    %113 = vmatpush1.xpose.msra.mxu0 0.0
    %114 = vmatprep.subr.mxu0 0.0
    %115 = vmatpush1.xpose.msra.mxu0 0.0
    %116 = vmatprep.subr.mxu0 0.0
    %117 = vmatpush1.xpose.msra.mxu0 0.0
    %118 = vmatprep.subr.mxu0 0.0
    %119 = vmatpush1.xpose.msra.mxu0 0.0
    %120 = vmatprep.subr.mxu0 0.0
    %121 = vmatpush1.xpose.msra.mxu0 0.0
    %122 = vmatprep.subr.mxu0 0.0
    %123 = vmatpush1.xpose.msra.mxu0 0.0
    %124 = vmatprep.mubr.f32.mxu0 0.0
    %125 = vmatmul.mubr.f32.gmra.mrb[0].mxu0 %v55
    %v126 = vpop.f32.mrb[0].mxu0
    %v127 = vadd.f32 0.0, %v126
    %v128 = vpop.f32.mrb[0].mxu0
    %129 = vdwg.mxu0
    %v130 = vmul.f32 %v52, %v53
    %v131 = vsel %vm39, %v130, 0.0
    %132 = vadd.xlane.f32.xlu0 %v131
    %v133 = vpop.xlane.xlu0 %132
    %v134 = vsub.f32 %v127, 14.285714
    %v135 = vmul.f32 %v134, 1.442695
    %v136 = vpow.pop %v135
    %vm137 = vcmask 64512
    %v138 = vsel %vm137, %v136, 0.0
    %139 = vadd.xlane.f32.xlu0 %v138
    %v140 = vpop.xlane.xlu0 %139
    %v141 = vlog2.pop %v140
    %v142 = vmul.f32 %v141, 0.6931472
    %v143 = vadd.f32 %v142, 14.285714
    %v144 = vsub.f32 %v143, %v133
    %vm145 = vcmask 7168
    %v146 = vsel %vm145, %v144, 0.0
    %147 = vadd.xlane.f32.xlu0 %v146
    %v148 = vpop.xlane.xlu0 %147
    %v149 = vrot.slane %v148, 4
    %v150 = vadd.f32 %v148, %v149
    %v151 = vrot.slane %v150, 2
    %v152 = vadd.f32 %v150, %v151
    %v153 = vrot.slane %v152, 1
    %v154 = vadd.f32 %v152, %v153
    %s155 = vtos %v154
    %v156 = vrcp.pop 8.0
    %s157 = vtos %v156
    %s158 = smul.f32 %s155, %s157
    %s159 = scalar_lea.smem [#allocation7], 0
    %160 = sst [smem:[%s159]] %s158
    // Predicated region
    $region18: #{tpu_custom_call.1} parent=1 // pred_check
      _
    $region19: #{tpu_custom_call.1} parent=1 // pred_check_branch
      %162 = sbr.rel (0) target = $region21
    $region20: #{tpu_custom_call.1} parent=1 // pred_region
      %s164 = ssub.s32 16, 16
      %165 = vsyncadd [#allocation4], %s164
      %168 = dma.smem_to_hbm [#allocation7], 16, %s2, [#allocation4]
    $region21: #{tpu_custom_call.1} parent=1 // pred_fallthru
      _
    // Predicated region
    $region22: #{tpu_custom_call.1} parent=1 // pred_check
      _
    $region23: #{tpu_custom_call.1} parent=1 // pred_check_branch
      %170 = sbr.rel (0) target = $region25
    $region24: #{tpu_custom_call.1} parent=1 // pred_region
      %171 = dma.done [#allocation4], 16
    $region25: #{tpu_custom_call.1} parent=1 // pred_fallthru
      _
    %172 = sfence
    %173 = vsyncpa [#allocation3], 1
    %174 = vsyncpa [#allocation6], 1
    %175 = vsyncpa [#allocation4], 1

</llo_original>
